<compile_context>
chip_gen: v7x
topology: tpu7x:2x2x1
jax: 0.10.0
libtpu: 0.0.40
codegen_flags: <defaults>
</compile_context>

<pallas_src>
import functools

import jax
import jax.numpy as jnp
from jax.experimental import pallas as pl
from jax.experimental.pallas import tpu as pltpu


def _round_up(x, m):
    return ((x + m - 1) // m) * m


def _pick_vmem_limit():
    """Generation-aware VMEM budget: ~3/4 of physical, capped at 100 MiB."""
    cap = 64 * 1024 * 1024                      # conservative fallback (v7x TC)
    try:
        info = pltpu.get_tpu_info()
        cap = int(getattr(info, "vmem_capacity_bytes", cap) or cap)
    except Exception:
        pass
    return int(min(cap * 3 // 4, 100 * 1024 * 1024))


_VMEM_LIMIT_BYTES = _pick_vmem_limit()


def _fused_agg_kernel(fea_dim, adj_ref, feats_ref, w1_ref, w2_ref, out_ref,
                      acc_ref):
    """One (side, node-tile) block; grid axis 2 reduces over M.

    adj_ref   : [2*tn, tm]  bf16  interleaved [self tile ; neigh tile] rows
    feats_ref : [tm, Fp]    bf16  features, with a 1.0 column at index fea_dim
    w1_ref    : [Fp, Ep]    bf16  top half of this side's weight  (self part)
    w2_ref    : [Fp, Ep]    bf16  bottom half of this side's weight (neigh part)
    out_ref   : [tn, Ep]    f32   lane-dense output tile (Ep % 128 == 0)
    acc_ref   : [2*tn, Fp]  f32   accumulator; column `fea_dim` = exact degree
    """
    k = pl.program_id(2)
    tn = out_ref.shape[0]

    @pl.when(k == 0)
    def _():
        acc_ref[...] = jnp.zeros_like(acc_ref)

    # Single MXU call per k-step: the feats RHS tile is pushed once for both
    # the self and neigh rows.  bf16 x bf16 with f32 accumulation.
    acc_ref[...] += jnp.dot(adj_ref[...], feats_ref[...],
                            preferred_element_type=jnp.float32)

    @pl.when(k == pl.num_programs(2) - 1)
    def _():
        acc = acc_ref[...]
        # Exact row degree accumulated (in f32) into column `fea_dim` thanks to
        # the ones-column appended to the feature table.
        deg = jnp.maximum(acc[:, fea_dim:fea_dim + 1], 1.0)        # [2*tn, 1]
        h = (acc * pl.reciprocal(deg, approx=True)).astype(w1_ref.dtype)
        # concat([h_self, h_neigh], -1) @ W  ==  h_self @ W1 + h_neigh @ W2
        # (the degree column and the F..Fp padding hit zero rows of W1/W2).
        z = (jnp.dot(h[:tn, :], w1_ref[...],
                     preferred_element_type=jnp.float32)
             + jnp.dot(h[tn:, :], w2_ref[...],
                       preferred_element_type=jnp.float32))
        out_ref[...] = jnp.maximum(z, 0.0)


@functools.partial(jax.jit, static_argnames=("tile_n", "tile_m"))
def aggregate_forward(features, w_agg1, w_agg3,
                      source_nei, target_nei, source_nei2, target_nei2,
                      *, tile_n=512, tile_m=1024):
    """Reproduces aggregate.forward with a single fused Pallas kernel.

    features            : [M, F] f32 feature table
    w_agg1, w_agg3      : [2F, E] f32 weights of agg1 / agg3
    *_nei, *_nei2       : [N, M] f32 binary adjacency (dense stand-in for sparse)
    returns             : (source_emb [N, E], target_emb [N, E]) f32
    """
    N, M = source_nei.shape
    Mf, F = features.shape
    E = w_agg1.shape[1]

    # Aligned tile sizes, clamped for small shapes.
    tile_n = min(tile_n, _round_up(N, 8))
    tile_m = min(tile_m, _round_up(M, 128))
    Np = _round_up(N, tile_n)
    Mp = _round_up(M, tile_m)
    Fp = _round_up(F + 1, 128)          # +1 lane reserved for the degree column
    Ep = _round_up(E, 128)

    # Stack the two mean_agg calls along a leading "side" axis and interleave
    # self/neigh node-tiles so each kernel block is one [2*tile_n, tile_m]
    # matmul LHS.  Binary adjacency is exact in bf16.
    #   side 0: source_emb = agg(source_nei, target_nei2, W1)
    #   side 1: target_emb = agg(target_nei, source_nei2, W3)
    def pad_adj(a, b):
        x = jnp.stack([a, b], axis=0).astype(jnp.bfloat16)           # [2, N, M]
        return jnp.pad(x, ((0, 0), (0, Np - N), (0, Mp - M)))        # [2, Np, Mp]

    adj_self = pad_adj(source_nei, target_nei)
    adj_neigh = pad_adj(target_nei2, source_nei2)
    nt = Np // tile_n
    adj_comb = jnp.concatenate(
        [adj_self.reshape(2, nt, tile_n, Mp),
         adj_neigh.reshape(2, nt, tile_n, Mp)],
        axis=2).reshape(2, 2 * Np, Mp)                               # [2, 2Np, Mp]
    # TODO(synk): accept adjacency pre-stacked/padded in bf16 upstream (or as
    #             sparse neighbor-index lists for a gather kernel) to remove
    #             this wrapper-side cast+pad pass entirely.

    # Features with a 1.0 column appended at index F: the main matmul then also
    # accumulates the exact row degree into accumulator column F.
    feats_aug = jnp.concatenate(
        [features, jnp.ones((Mf, 1), features.dtype)], axis=1)       # [M, F+1]
    feats_p = jnp.pad(feats_aug.astype(jnp.bfloat16),
                      ((0, Mp - Mf), (0, Fp - F - 1)))               # [Mp, Fp]

    # Split each [2F, E] weight into halves, pad to [Fp, Ep], bf16, stack sides.
    def split_pad_w(w):
        w1 = jnp.pad(w[:F, :], ((0, Fp - F), (0, Ep - E)))
        w2 = jnp.pad(w[F:, :], ((0, Fp - F), (0, Ep - E)))
        return w1, w2

    w1a, w2a = split_pad_w(w_agg1)
    w1b, w2b = split_pad_w(w_agg3)
    w1 = jnp.stack([w1a, w1b], axis=0).astype(jnp.bfloat16)          # [2, Fp, Ep]
    w2 = jnp.stack([w2a, w2b], axis=0).astype(jnp.bfloat16)          # [2, Fp, Ep]

    grid = (2, Np // tile_n, Mp // tile_m)
    kernel = functools.partial(_fused_agg_kernel, F)

    out = pl.pallas_call(
        kernel,
        out_shape=jax.ShapeDtypeStruct((2, Np, Ep), jnp.float32),
        grid_spec=pltpu.PrefetchScalarGridSpec(
            num_scalar_prefetch=0,
            grid=grid,
            in_specs=[
                # Interleaved [self ; neigh] node-tile of adjacency.
                pl.BlockSpec((None, 2 * tile_n, tile_m),
                             lambda s, i, k: (s, i, k)),
                # TODO(synk): on 128 MiB VMEM parts (v5e/v6e) with small Mp*Fp,
                #             a fully VMEM-resident feature table ((Mp, Fp)
                #             block, constant index_map) removes the per
                #             node-tile re-streaming of feats; kept tiled here
                #             so the same kernel fits v7x's 64 MiB VMEM.
                pl.BlockSpec((tile_m, Fp), lambda s, i, k: (k, 0)),
                pl.BlockSpec((None, Fp, Ep), lambda s, i, k: (s, 0, 0)),
                pl.BlockSpec((None, Fp, Ep), lambda s, i, k: (s, 0, 0)),
            ],
            out_specs=pl.BlockSpec((None, tile_n, Ep),
                                   lambda s, i, k: (s, i, 0)),
            scratch_shapes=[pltpu.VMEM((2 * tile_n, Fp), jnp.float32)],
        ),
        compiler_params=pltpu.CompilerParams(
            dimension_semantics=("parallel", "parallel", "arbitrary"),
            vmem_limit_bytes=_VMEM_LIMIT_BYTES,
        ),
    )(adj_comb, feats_p, w1, w2)

    source_emb = out[0, :N, :E]
    target_emb = out[1, :N, :E]
    return source_emb, target_emb


def _xavier_uniform(key, shape):
    fan_in, fan_out = shape[0], shape[1]
    limit = (6.0 / (fan_in + fan_out)) ** 0.5
    return jax.random.uniform(key, shape, jnp.float32, -limit, limit)


if __name__ == "__main__":
    key = jax.random.PRNGKey(0)
    k_feat, k_w1, k_w3, k_a1, k_a2, k_a3, k_a4 = jax.random.split(key, 7)

    # Small, consistent shapes.
    M = 16        # rows of the feature table
    N = 16        # number of nodes embedded per side
    fea_dim = 32
    emb_dim = 32

    features = jax.random.normal(k_feat, (M, fea_dim), jnp.float32)

    # Deterministic xavier-uniform weights for agg1 / agg3 : [2*fea_dim, emb_dim]
    w_agg1 = _xavier_uniform(k_w1, (2 * fea_dim, emb_dim))
    w_agg3 = _xavier_uniform(k_w3, (2 * fea_dim, emb_dim))

    # Binary adjacency (dense stand-in for the sparse neighbor lists).
    def rand_adj(k):
        return (jax.random.uniform(k, (N, M)) < 0.3).astype(jnp.float32)

    source_nei = rand_adj(k_a1)
    target_nei = rand_adj(k_a2)
    source_nei2 = rand_adj(k_a3)
    target_nei2 = rand_adj(k_a4)

    source_emb, target_emb = aggregate_forward(
        features, w_agg1, w_agg3,
        source_nei, target_nei, source_nei2, target_nei2)
    jax.block_until_ready((source_emb, target_emb))

    # Pure-JAX reference with the same bf16 rounding points the kernel uses
    # (adj / feats / h / W in bf16, accumulation and degree math in f32).
    def ref_agg(adj_s, adj_n, feats, w):
        bf = lambda x: x.astype(jnp.bfloat16).astype(jnp.float32)
        f = bf(feats)
        deg_s = jnp.maximum(adj_s.sum(-1, keepdims=True), 1.0)
        deg_n = jnp.maximum(adj_n.sum(-1, keepdims=True), 1.0)
        h_s = bf(bf(adj_s) @ f / deg_s)
        h_n = bf(bf(adj_n) @ f / deg_n)
        h = jnp.concatenate([h_s, h_n], -1)
        return jnp.maximum(h @ bf(w), 0.0)

    ref_src = ref_agg(source_nei, target_nei2, features, w_agg1)
    ref_tgt = ref_agg(target_nei, source_nei2, features, w_agg3)
    assert source_emb.shape == (N, emb_dim) and target_emb.shape == (N, emb_dim)
    assert jnp.allclose(source_emb, ref_src, atol=2e-2, rtol=2e-2)
    assert jnp.allclose(target_emb, ref_tgt, atol=2e-2, rtol=2e-2)

    print("KERNEL_OK")
</pallas_src>

<mosaic_0001>
module attributes {stable_mosaic.version = 11 : i64} {
  func.func @_fused_agg_kernel(%arg0: i32, %arg1: i32, %arg2: i32, %arg3: memref<1x32x128xbf16, #tpu.memory_space<vmem>>, %arg4: memref<128x128xbf16, #tpu.memory_space<vmem>>, %arg5: memref<1x128x128xbf16, #tpu.memory_space<vmem>>, %arg6: memref<1x128x128xbf16, #tpu.memory_space<vmem>>, %arg7: memref<1x16x128xf32, #tpu.memory_space<vmem>>, %arg8: memref<32x128xf32, #tpu.memory_space<vmem>>) attributes {dimension_semantics = [#tpu.dimension_semantics<parallel>, #tpu.dimension_semantics<parallel>, #tpu.dimension_semantics<arbitrary>], iteration_bounds = array<i64: 2, 1, 1>, scalar_prefetch = 0 : i64, scratch_operands = 1 : i64, tpu.core_type = #tpu.core_type<tc>, window_params = [{transform_indices = @transform_0, window_bounds = array<i64: 1, 32, 128>}, {transform_indices = @transform_1, window_bounds = array<i64: 128, 128>}, {transform_indices = @transform_2, window_bounds = array<i64: 1, 128, 128>}, {transform_indices = @transform_3, window_bounds = array<i64: 1, 128, 128>}, {transform_indices = @transform_4, window_bounds = array<i64: 1, 16, 128>}]} {
    %c0_i32 = arith.constant 0 : i32
    %0 = arith.cmpi eq, %arg2, %c0_i32 : i32
    %1 = arith.extui %0 : i1 to i32
    %c0_i32_0 = arith.constant 0 : i32
    %2 = arith.cmpi ne, %1, %c0_i32_0 : i32
    scf.if %2 {
      %cst_11 = arith.constant 0.000000e+00 : f32
      %13 = vector.broadcast %cst_11 : f32 to vector<32x128xf32>
      %c0_12 = arith.constant 0 : index
      %c0_13 = arith.constant 0 : index
      %14 = vector.load %arg8[%c0_12, %c0_13] : memref<32x128xf32, #tpu.memory_space<vmem>>, vector<32x128xf32>
      tpu.vector_store %arg8[%c0_12, %c0_13], %13 {strides = array<i32>} : memref<32x128xf32, #tpu.memory_space<vmem>>, vector<32x128xf32>,
    } else {
    }
    %c0 = arith.constant 0 : index
    %c0_1 = arith.constant 0 : index
    %3 = vector.load %arg8[%c0, %c0_1] : memref<32x128xf32, #tpu.memory_space<vmem>>, vector<32x128xf32>
    %c0_2 = arith.constant 0 : index
    %c0_3 = arith.constant 0 : index
    %c0_4 = arith.constant 0 : index
    %4 = vector.load %arg3[%c0_2, %c0_3, %c0_4] : memref<1x32x128xbf16, #tpu.memory_space<vmem>>, vector<1x32x128xbf16>
    %5 = vector.shape_cast %4 : vector<1x32x128xbf16> to vector<32x128xbf16>
    %c0_5 = arith.constant 0 : index
    %c0_6 = arith.constant 0 : index
    %6 = vector.load %arg4[%c0_5, %c0_6] : memref<128x128xbf16, #tpu.memory_space<vmem>>, vector<128x128xbf16>
    %cst = arith.constant dense<0.000000e+00> : vector<32x128xf32>
    %7 = tpu.matmul %5, %6, %cst {dimension_numbers = #tpu.dot_dimension_numbers<[1], [0], [0], [1], [0, 0, 1, 1], [], []>} : vector<32x128xbf16>, vector<128x128xbf16>, vector<32x128xf32> -> vector<32x128xf32>
    %8 = arith.addf %3, %7 : vector<32x128xf32>
    %c0_7 = arith.constant 0 : index
    %c0_8 = arith.constant 0 : index
    %9 = vector.load %arg8[%c0_7, %c0_8] : memref<32x128xf32, #tpu.memory_space<vmem>>, vector<32x128xf32>
    tpu.vector_store %arg8[%c0_7, %c0_8], %8 {strides = array<i32>} : memref<32x128xf32, #tpu.memory_space<vmem>>, vector<32x128xf32>,
    %c0_i32_9 = arith.constant 0 : i32
    %10 = arith.cmpi eq, %arg2, %c0_i32_9 : i32
    %11 = arith.extui %10 : i1 to i32
    %c0_i32_10 = arith.constant 0 : i32
    %12 = arith.cmpi ne, %11, %c0_i32_10 : i32
    scf.if %12 {
      %c0_11 = arith.constant 0 : index
      %c0_12 = arith.constant 0 : index
      %13 = vector.load %arg8[%c0_11, %c0_12] : memref<32x128xf32, #tpu.memory_space<vmem>>, vector<32x128xf32>
      %14 = vector.extract_strided_slice %13 {offsets = [0, 32], sizes = [32, 1], strides = [1, 1]} : vector<32x128xf32> to vector<32x1xf32>
      %cst_13 = arith.constant 1.000000e+00 : f32
      %15 = vector.broadcast %cst_13 : f32 to vector<32x1xf32>
      %16 = arith.maximumf %14, %15 : vector<32x1xf32>
      %17 = tpu.reciprocal %16 {approx = true} : vector<32x1xf32> -> vector<32x1xf32>
      %18 = vector.broadcast %17 : vector<32x1xf32> to vector<32x128xf32>
      %19 = arith.mulf %13, %18 : vector<32x128xf32>
      %20 = arith.truncf %19 : vector<32x128xf32> to vector<32x128xbf16>
      %21 = vector.extract_strided_slice %20 {offsets = [0, 0], sizes = [16, 128], strides = [1, 1]} : vector<32x128xbf16> to vector<16x128xbf16>
      %c0_14 = arith.constant 0 : index
      %c0_15 = arith.constant 0 : index
      %c0_16 = arith.constant 0 : index
      %22 = vector.load %arg5[%c0_14, %c0_15, %c0_16] : memref<1x128x128xbf16, #tpu.memory_space<vmem>>, vector<1x128x128xbf16>
      %23 = vector.shape_cast %22 : vector<1x128x128xbf16> to vector<128x128xbf16>
      %cst_17 = arith.constant dense<0.000000e+00> : vector<16x128xf32>
      %24 = tpu.matmul %21, %23, %cst_17 {dimension_numbers = #tpu.dot_dimension_numbers<[1], [0], [0], [1], [0, 0, 1, 1], [], []>} : vector<16x128xbf16>, vector<128x128xbf16>, vector<16x128xf32> -> vector<16x128xf32>
      %25 = vector.extract_strided_slice %20 {offsets = [16, 0], sizes = [16, 128], strides = [1, 1]} : vector<32x128xbf16> to vector<16x128xbf16>
      %c0_18 = arith.constant 0 : index
      %c0_19 = arith.constant 0 : index
      %c0_20 = arith.constant 0 : index
      %26 = vector.load %arg6[%c0_18, %c0_19, %c0_20] : memref<1x128x128xbf16, #tpu.memory_space<vmem>>, vector<1x128x128xbf16>
      %27 = vector.shape_cast %26 : vector<1x128x128xbf16> to vector<128x128xbf16>
      %cst_21 = arith.constant dense<0.000000e+00> : vector<16x128xf32>
      %28 = tpu.matmul %25, %27, %cst_21 {dimension_numbers = #tpu.dot_dimension_numbers<[1], [0], [0], [1], [0, 0, 1, 1], [], []>} : vector<16x128xbf16>, vector<128x128xbf16>, vector<16x128xf32> -> vector<16x128xf32>
      %29 = arith.addf %24, %28 : vector<16x128xf32>
      %cst_22 = arith.constant 0.000000e+00 : f32
      %30 = vector.broadcast %cst_22 : f32 to vector<16x128xf32>
      %31 = arith.maximumf %29, %30 : vector<16x128xf32>
      %c0_23 = arith.constant 0 : index
      %c0_24 = arith.constant 0 : index
      %c0_25 = arith.constant 0 : index
      %32 = vector.load %arg7[%c0_23, %c0_24, %c0_25] : memref<1x16x128xf32, #tpu.memory_space<vmem>>, vector<1x16x128xf32>
      %33 = vector.shape_cast %32 : vector<1x16x128xf32> to vector<16x128xf32>
      %34 = vector.shape_cast %31 : vector<16x128xf32> to vector<1x16x128xf32>
      tpu.vector_store %arg7[%c0_23, %c0_24, %c0_25], %34 {strides = array<i32>} : memref<1x16x128xf32, #tpu.memory_space<vmem>>, vector<1x16x128xf32>,
    } else {
    }
    return
  }
  func.func @transform_0(%arg0: i32, %arg1: i32, %arg2: i32) -> (i32, i32, i32) {
    %c0_i32 = arith.constant 0 : i32
    return %arg0, %arg1, %arg2 : i32, i32, i32
  }
  func.func @transform_1(%arg0: i32, %arg1: i32, %arg2: i32) -> (i32, i32) {
    %c0_i32 = arith.constant 0 : i32
    %c0_i32_0 = arith.constant 0 : i32
    return %arg2, %c0_i32 : i32, i32
  }
  func.func @transform_2(%arg0: i32, %arg1: i32, %arg2: i32) -> (i32, i32, i32) {
    %c0_i32 = arith.constant 0 : i32
    %c0_i32_0 = arith.constant 0 : i32
    %c0_i32_1 = arith.constant 0 : i32
    return %arg0, %c0_i32, %c0_i32_0 : i32, i32, i32
  }
  func.func @transform_3(%arg0: i32, %arg1: i32, %arg2: i32) -> (i32, i32, i32) {
    %c0_i32 = arith.constant 0 : i32
    %c0_i32_0 = arith.constant 0 : i32
    %c0_i32_1 = arith.constant 0 : i32
    return %arg0, %c0_i32, %c0_i32_0 : i32, i32, i32
  }
  func.func @transform_4(%arg0: i32, %arg1: i32, %arg2: i32) -> (i32, i32, i32) {
    %c0_i32 = arith.constant 0 : i32
    %c0_i32_0 = arith.constant 0 : i32
    return %arg0, %arg1, %c0_i32 : i32, i32, i32
  }
}

</mosaic_0001>

<llo_original>
// kernel: aggregate_forward.1
$region0: #{aggregate_forward.1}
  #allocation0 [shape = 'u32[]', space=smem, size = 0x4, offset = 0x4, fixed_abs, tag = 'smem constant byte address 0x4 - core index']
  #allocation1 [shape = 'u32[144,128]{1,0:T(1,128)}', space=vmem, size = 0x12000, scoped, tag = 'internal scratch']
  #allocation2 [shape = 'f32[32,128]{1,0:T(8,128)}', space=vmem, size = 0x4000, scoped, tag = 'scratch operand']
  %s0 = inlined_call_operand.vmem [shape: bf16[2,32,128], index: 0, kind: input, shape index: {}]
  %s1 = inlined_call_operand.vmem [shape: bf16[128,128], index: 1, kind: input, shape index: {}]
  %s2 = inlined_call_operand.vmem [shape: bf16[2,128,128], index: 2, kind: input, shape index: {}]
  %s3 = inlined_call_operand.vmem [shape: bf16[2,128,128], index: 3, kind: input, shape index: {}]
  %s4 = inlined_call_operand.vmem [shape: f32[2,16,128], index: 4, kind: output, shape index: {}]
  %s5 = sld [smem:[#allocation0]]
  $region57: #{aggregate_forward.1} parent=0
    _
  %s7 = ssub.s32 1, %s5
  %s8 = scalar_select 0, %s7, %s5
  loop: start=0, step=1, limit=4
  $region2: #{aggregate_forward.1} parent=0 // loop_pre_header
    _
  $region3: #{aggregate_forward.1} parent=0 // loop_header
    %s10 = sphi 0, %s14
    %p11 = scmp.ge.s32.totalorder %s10, 4
    %s17 = sphi 0, %s36
    %s18 = sphi 0, %s32
    %s19 = sphi 0, %s28
    %s20 = sphi 0, %s17
    %s21 = sphi 0, %s18
    %s22 = sphi 0, %s19
    %s23 = sphi 0, %s20
    %s24 = sphi 0, %s21
    %s25 = sphi 0, %s22
    %s43 = sphi 0, %s45
    %s46 = sphi 0, %s43
    %s47 = sphi 0, %s46
    %s63 = sphi 0, %s47
    %s69 = sphi 0, %s71
    %s72 = sphi 0, %s69
    %s73 = sphi 0, %s72
    %s89 = sphi 0, %s73
    %s95 = sphi 0, %s97
    %s98 = sphi 0, %s95
    %s99 = sphi 0, %s98
    %s115 = sphi 0, %s99
    %s121 = sphi 0, %s123
    %s124 = sphi 0, %s121
    %s125 = sphi 0, %s124
    %s141 = sphi 0, %s125
    %s149 = sphi 0, %s151
    %s152 = sphi 0, %s149
    %s153 = sphi 0, %s152
    %s169 = sphi 0, %s153
  $region4: #{aggregate_forward.1} parent=0 // loop_header_branch
    %13 = sbr.rel (%p11) target = $region8
  $region5: #{aggregate_forward.1} parent=0 // loop_body
    %s15 = ssub.s32 %s10, 1
    %s16 = ssub.s32 %s10, 2
    %s26 = sadd.s32 1, %s19
    %p27 = scmp.ge.s32.totalorder %s26, 1
    %s28 = scalar_select %p27, 0, %s26
    %s29 = sadd.s32 1, %s18
    %s30 = scalar_select %p27, %s29, %s18
    %p31 = scmp.ge.s32.totalorder %s30, 1
    %s32 = scalar_select %p31, 0, %s30
    %s33 = sadd.s32 1, %s17
    %s34 = scalar_select %p31, %s33, %s17
    %p35 = scmp.ge.s32.totalorder %s34, 2
    %s36 = scalar_select %p35, 0, %s34
    %s37 = ssub.s32 %s17, %s36
    %s38 = ssub.s32 %s18, %s32
    %s39 = sor.u32 %s37, %s38
    %s40 = ssub.s32 %s19, %s28
    %s41 = sor.u32 %s39, %s40
    %p42 = scmp.eq.s32.totalorder %s41, 0
    %s44 = sadd.s32 %s43, 1
    %s45 = scalar_select %p42, %s43, %s44
    %p48 = pneg %p42
    %p49 = scmp.eq.s32.totalorder %s10, 1
    %p50 = por %p48, %p49
    %p51 = scmp.ne.s32.totalorder %s43, %s46
    %p52 = scmp.eq.s32.totalorder %s10, 0
    %p53 = por %p51, %p52
    %p54 = scmp.ne.s32.totalorder %s43, %s46
    %p55 = scmp.eq.s32.totalorder %s15, 1
    %p56 = por %p54, %p55
    %p57 = scmp.ne.s32.totalorder %s46, %s47
    %p58 = scmp.eq.s32.totalorder %s15, 0
    %p59 = por %p57, %p58
    %p60 = scmp.ne.s32.totalorder %s46, %s47
    %p61 = scmp.eq.s32.totalorder %s16, 1
    %p62 = por %p60, %p61
    %p64 = scmp.ne.s32.totalorder %s47, %s63
    %p65 = scmp.eq.s32.totalorder %s16, 0
    %p66 = por %p64, %p65
    %s67 = ssub.s32 %s19, %s28
    %p68 = scmp.eq.s32.totalorder %s67, 0
    %s70 = sadd.s32 %s69, 1
    %s71 = scalar_select %p68, %s69, %s70
    %p74 = pneg %p68
    %p75 = scmp.eq.s32.totalorder %s10, 1
    %p76 = por %p74, %p75
    %p77 = scmp.ne.s32.totalorder %s69, %s72
    %p78 = scmp.eq.s32.totalorder %s10, 0
    %p79 = por %p77, %p78
    %p80 = scmp.ne.s32.totalorder %s69, %s72
    %p81 = scmp.eq.s32.totalorder %s15, 1
    %p82 = por %p80, %p81
    %p83 = scmp.ne.s32.totalorder %s72, %s73
    %p84 = scmp.eq.s32.totalorder %s15, 0
    %p85 = por %p83, %p84
    %p86 = scmp.ne.s32.totalorder %s72, %s73
    %p87 = scmp.eq.s32.totalorder %s16, 1
    %p88 = por %p86, %p87
    %p90 = scmp.ne.s32.totalorder %s73, %s89
    %p91 = scmp.eq.s32.totalorder %s16, 0
    %p92 = por %p90, %p91
    %s93 = ssub.s32 %s17, %s36
    %p94 = scmp.eq.s32.totalorder %s93, 0
    %s96 = sadd.s32 %s95, 1
    %s97 = scalar_select %p94, %s95, %s96
    %p100 = pneg %p94
    %p101 = scmp.eq.s32.totalorder %s10, 1
    %p102 = por %p100, %p101
    %p103 = scmp.ne.s32.totalorder %s95, %s98
    %p104 = scmp.eq.s32.totalorder %s10, 0
    %p105 = por %p103, %p104
    %p106 = scmp.ne.s32.totalorder %s95, %s98
    %p107 = scmp.eq.s32.totalorder %s15, 1
    %p108 = por %p106, %p107
    %p109 = scmp.ne.s32.totalorder %s98, %s99
    %p110 = scmp.eq.s32.totalorder %s15, 0
    %p111 = por %p109, %p110
    %p112 = scmp.ne.s32.totalorder %s98, %s99
    %p113 = scmp.eq.s32.totalorder %s16, 1
    %p114 = por %p112, %p113
    %p116 = scmp.ne.s32.totalorder %s99, %s115
    %p117 = scmp.eq.s32.totalorder %s16, 0
    %p118 = por %p116, %p117
    %s119 = ssub.s32 %s17, %s36
    %p120 = scmp.eq.s32.totalorder %s119, 0
    %s122 = sadd.s32 %s121, 1
    %s123 = scalar_select %p120, %s121, %s122
    %p126 = pneg %p120
    %p127 = scmp.eq.s32.totalorder %s10, 1
    %p128 = por %p126, %p127
    %p129 = scmp.ne.s32.totalorder %s121, %s124
    %p130 = scmp.eq.s32.totalorder %s10, 0
    %p131 = por %p129, %p130
    %p132 = scmp.ne.s32.totalorder %s121, %s124
    %p133 = scmp.eq.s32.totalorder %s15, 1
    %p134 = por %p132, %p133
    %p135 = scmp.ne.s32.totalorder %s124, %s125
    %p136 = scmp.eq.s32.totalorder %s15, 0
    %p137 = por %p135, %p136
    %p138 = scmp.ne.s32.totalorder %s124, %s125
    %p139 = scmp.eq.s32.totalorder %s16, 1
    %p140 = por %p138, %p139
    %p142 = scmp.ne.s32.totalorder %s125, %s141
    %p143 = scmp.eq.s32.totalorder %s16, 0
    %p144 = por %p142, %p143
    %s145 = ssub.s32 %s17, %s36
    %s146 = ssub.s32 %s18, %s32
    %s147 = sor.u32 %s145, %s146
    %p148 = scmp.eq.s32.totalorder %s147, 0
    %s150 = sadd.s32 %s149, 1
    %s151 = scalar_select %p148, %s149, %s150
    %p154 = pneg %p148
    %p155 = scmp.eq.s32.totalorder %s10, 1
    %p156 = por %p154, %p155
    %p157 = scmp.ne.s32.totalorder %s149, %s152
    %p158 = scmp.eq.s32.totalorder %s10, 0
    %p159 = por %p157, %p158
    %p160 = scmp.ne.s32.totalorder %s149, %s152
    %p161 = scmp.eq.s32.totalorder %s15, 1
    %p162 = por %p160, %p161
    %p163 = scmp.ne.s32.totalorder %s152, %s153
    %p164 = scmp.eq.s32.totalorder %s15, 0
    %p165 = por %p163, %p164
    %p166 = scmp.ne.s32.totalorder %s152, %s153
    %p167 = scmp.eq.s32.totalorder %s16, 1
    %p168 = por %p166, %p167
    %p170 = scmp.ne.s32.totalorder %s153, %s169
    %p171 = scmp.eq.s32.totalorder %s16, 0
    %p172 = por %p170, %p171
    %p173 = scmp.le.s32.totalorder 1, %s10
    %p174 = scmp.lt.s32.totalorder %s10, 3
    %p175 = pnand %p173, %p174
    %p176 = pneg %p175
    // Predicated region
    $region9: #{aggregate_forward.1} parent=5 // pred_check
      _
    $region10: #{aggregate_forward.1} parent=5 // pred_check_branch
      %178 = sbr.rel (%p175) target = $region12
    $region11: #{aggregate_forward.1} parent=5 // pred_region
      %s179 = ssub.s32 %s10, 1
      // Predicated region
      $region13: #{aggregate_forward.1} parent=11 // pred_check
        %p180 = pneg %p85
      $region14: #{aggregate_forward.1} parent=11 // pred_check_branch
        %182 = sbr.rel (%p180) target = $region16
      $region15: #{aggregate_forward.1} parent=11 // pred_region
        %s183 = smul.u32 16, %s22
        %p184 = scmp.lt.s32.totalorder %s183, 15
        %s185 = scalar_select %p184, %s183, 15
        %s186 = smul.addr %s185, 4
        %s187 = scalar_lea.vmem %s1, %s186
        %s188 = smul.u32 16, %s22
      $region16: #{aggregate_forward.1} parent=11 // pred_fallthru
        _
    $region12: #{aggregate_forward.1} parent=5 // pred_fallthru
      _
    %p189 = scmp.lt.s32.totalorder %s10, 2
    // Predicated region
    $region17: #{aggregate_forward.1} parent=5 // pred_check
      %p190 = pneg %p189
    $region18: #{aggregate_forward.1} parent=5 // pred_check_branch
      %192 = sbr.rel (%p190) target = $region20
    $region19: #{aggregate_forward.1} parent=5 // pred_region
      // Predicated region
      $region21: #{aggregate_forward.1} parent=19 // pred_check
        %p193 = pneg %p53
      $region22: #{aggregate_forward.1} parent=19 // pred_check_branch
        %195 = sbr.rel (%p193) target = $region24
      $region23: #{aggregate_forward.1} parent=19 // pred_region
        %s196 = smul.u32 4, %s18
        %p197 = scmp.lt.s32.totalorder %s17, 1
        %s198 = scalar_select %p197, %s17, 1
        %p199 = scmp.lt.s32.totalorder %s196, 3
        %s200 = scalar_select %p199, %s196, 3
        %p201 = scmp.lt.s32.totalorder %s19, 0
        %s202 = scalar_select %p201, %s19, 0
        %s203 = sadd.s32 %s202, %s200
        %s204 = smul.addr %s198, 4
        %s205 = sadd.s32 %s203, %s204
        %s206 = smul.addr %s205, 4
        %s207 = scalar_lea.vmem %s0, %s206
        %s208 = smul.u32 4, %s18
      $region24: #{aggregate_forward.1} parent=19 // pred_fallthru
        _
      // Predicated region
      $region25: #{aggregate_forward.1} parent=19 // pred_check
        %p209 = pneg %p105
      $region26: #{aggregate_forward.1} parent=19 // pred_check_branch
        %211 = sbr.rel (%p209) target = $region28
      $region27: #{aggregate_forward.1} parent=19 // pred_region
        %p212 = scmp.lt.s32.totalorder %s17, 1
        %s213 = scalar_select %p212, %s17, 1
        %s214 = smul.addr %s213, 16
        %s215 = smul.addr %s214, 4
        %s216 = scalar_lea.vmem %s2, %s215
      $region28: #{aggregate_forward.1} parent=19 // pred_fallthru
        _
      // Predicated region
      $region29: #{aggregate_forward.1} parent=19 // pred_check
        %p217 = pneg %p131
      $region30: #{aggregate_forward.1} parent=19 // pred_check_branch
        %219 = sbr.rel (%p217) target = $region32
      $region31: #{aggregate_forward.1} parent=19 // pred_region
        %p220 = scmp.lt.s32.totalorder %s17, 1
        %s221 = scalar_select %p220, %s17, 1
        %s222 = smul.addr %s221, 16
        %s223 = smul.addr %s222, 4
        %s224 = scalar_lea.vmem %s3, %s223
      $region32: #{aggregate_forward.1} parent=19 // pred_fallthru
        _
    $region20: #{aggregate_forward.1} parent=5 // pred_fallthru
      _
    %p225 = scmp.le.s32.totalorder 1, %s10
    %p226 = scmp.lt.s32.totalorder %s10, 3
    %p227 = pnand %p225, %p226
    %p228 = pneg %p227
    // Predicated region
    $region33: #{aggregate_forward.1} parent=5 // pred_check
      _
    $region34: #{aggregate_forward.1} parent=5 // pred_check_branch
      %230 = sbr.rel (%p227) target = $region36
    $region35: #{aggregate_forward.1} parent=5 // pred_region
      %s231 = ssub.s32 %s10, 1
      %s232 = smul.u32 4, %s21
      %p233 = scmp.lt.s32.totalorder %s20, 1
      %s234 = scalar_select %p233, %s20, 1
      %p235 = scmp.lt.s32.totalorder %s232, 3
      %s236 = scalar_select %p235, %s232, 3
      %p237 = scmp.lt.s32.totalorder %s22, 0
      %s238 = scalar_select %p237, %s22, 0
      %s239 = sadd.s32 %s238, %s236
      %s240 = smul.addr %s234, 4
      %s241 = sadd.s32 %s239, %s240
      %s242 = smul.addr %s241, 4
      %s243 = scalar_lea.vmem %s0, %s242
      %p244 = pneg %p59
      %p245 = pneg %p56
      %s246 = smul.u32 16, %s22
      %p247 = scmp.lt.s32.totalorder %s246, 15
      %s248 = scalar_select %p247, %s246, 15
      %s249 = smul.addr %s248, 4
      %s250 = scalar_lea.vmem %s1, %s249
      %p251 = pneg %p85
      %p252 = pneg %p82
      %p253 = scmp.lt.s32.totalorder %s20, 1
      %s254 = scalar_select %p253, %s20, 1
      %s255 = smul.addr %s254, 16
      %s256 = smul.addr %s255, 4
      %s257 = scalar_lea.vmem %s2, %s256
      %p258 = pneg %p111
      %p259 = pneg %p108
      %p260 = scmp.lt.s32.totalorder %s20, 1
      %s261 = scalar_select %p260, %s20, 1
      %s262 = smul.addr %s261, 16
      %s263 = smul.addr %s262, 4
      %s264 = scalar_lea.vmem %s3, %s263
      %p265 = pneg %p137
      %p266 = pneg %p134
      %p267 = pneg %p165
      %p268 = pneg %p162
      %s269 = smul.u32 2, %s21
      %p270 = scmp.lt.s32.totalorder %s20, 1
      %s271 = scalar_select %p270, %s20, 1
      %p272 = scmp.lt.s32.totalorder %s269, 1
      %s273 = scalar_select %p272, %s269, 1
      %s274 = smul.addr %s271, 2
      %s275 = sadd.s32 %s273, %s274
      %s276 = smul.addr %s275, 8
      %s277 = scalar_lea.vmem %s4, %s276
      %s278 = smul.u32 4, %s21
      %p279 = scmp.lt.s32.totalorder %s20, 1
      %s280 = scalar_select %p279, %s20, 1
      %p281 = scmp.lt.s32.totalorder %s278, 3
      %s282 = scalar_select %p281, %s278, 3
      %p283 = scmp.lt.s32.totalorder %s22, 0
      %s284 = scalar_select %p283, %s22, 0
      %s285 = sadd.s32 %s284, %s282
      %s286 = smul.addr %s280, 4
      %s287 = sadd.s32 %s285, %s286
      %s288 = smul.addr %s287, 4
      %s289 = scalar_lea.vmem %s0, %s288
      %s290 = smul.u32 4, %s21
      %s291 = smul.u32 16, %s22
      %p292 = scmp.lt.s32.totalorder %s291, 15
      %s293 = scalar_select %p292, %s291, 15
      %s294 = smul.addr %s293, 4
      %s295 = scalar_lea.vmem %s1, %s294
      %s296 = smul.u32 16, %s22
      %p297 = scmp.lt.s32.totalorder %s20, 1
      %s298 = scalar_select %p297, %s20, 1
      %s299 = smul.addr %s298, 16
      %s300 = smul.addr %s299, 4
      %s301 = scalar_lea.vmem %s2, %s300
      %p302 = scmp.lt.s32.totalorder %s20, 1
      %s303 = scalar_select %p302, %s20, 1
      %s304 = smul.addr %s303, 16
      %s305 = smul.addr %s304, 4
      %s306 = scalar_lea.vmem %s3, %s305
      %s307 = smul.u32 2, %s21
      %p308 = scmp.lt.s32.totalorder %s20, 1
      %s309 = scalar_select %p308, %s20, 1
      %p310 = scmp.lt.s32.totalorder %s307, 1
      %s311 = scalar_select %p310, %s307, 1
      %s312 = smul.addr %s309, 2
      %s313 = sadd.s32 %s311, %s312
      %s314 = smul.addr %s313, 8
      %s315 = scalar_lea.vmem %s4, %s314
      %s316 = smul.u32 2, %s21
      %p318 = scmp.eq.s32.totalorder %s22, 0
      // Predicated region
      $region37: #{aggregate_forward.1} parent=35 // pred_check
        %p319 = pneg %p318
      $region38: #{aggregate_forward.1} parent=35 // pred_check_branch
        %321 = sbr.rel (%p319) target = $region40
      $region39: #{aggregate_forward.1} parent=35 // pred_region
        %322 = vst [vmem:[#allocation2] sm:$0xff] 0.0
        %323 = vst [vmem:[#allocation2 + $0x8] sm:$0xff] 0.0
        %324 = vst [vmem:[#allocation2 + $0x10] sm:$0xff] 0.0
        %325 = vst [vmem:[#allocation2 + $0x18] sm:$0xff] 0.0
      $region40: #{aggregate_forward.1} parent=35 // pred_fallthru
        _
      %v326 = vld [vmem:[#allocation2] sm:$0xff]
      %v327 = vld [vmem:[#allocation2 + $0x8] sm:$0xff]
      %v328 = vld [vmem:[#allocation2 + $0x10] sm:$0xff]
      %v329 = vld [vmem:[#allocation2 + $0x18] sm:$0xff]
      %v330 = vld [vmem:[%s289] sm:$0xf]
      %v331 = vld [vmem:[%s289 + $0x4] sm:$0xf]
      %v332 = vld [vmem:[%s289 + $0x8] sm:$0xf]
      %v333 = vld [vmem:[%s289 + $0xc] sm:$0xf]
      %v334 = vld [vmem:[%s295] sm:$0xf]
      %v335 = vld [vmem:[%s295 + $0x4] sm:$0xf]
      %v336 = vld [vmem:[%s295 + $0x8] sm:$0xf]
      %v337 = vld [vmem:[%s295 + $0xc] sm:$0xf]
      %v338 = vld [vmem:[%s295 + $0x10] sm:$0xf]
      %v339 = vld [vmem:[%s295 + $0x14] sm:$0xf]
      %v340 = vld [vmem:[%s295 + $0x18] sm:$0xf]
      %v341 = vld [vmem:[%s295 + $0x1c] sm:$0xf]
      %v342 = vld [vmem:[%s295 + $0x20] sm:$0xf]
      %v343 = vld [vmem:[%s295 + $0x24] sm:$0xf]
      %v344 = vld [vmem:[%s295 + $0x28] sm:$0xf]
      %v345 = vld [vmem:[%s295 + $0x2c] sm:$0xf]
      %v346 = vld [vmem:[%s295 + $0x30] sm:$0xf]
      %v347 = vld [vmem:[%s295 + $0x34] sm:$0xf]
      %v348 = vld [vmem:[%s295 + $0x38] sm:$0xf]
      %v349 = vld [vmem:[%s295 + $0x3c] sm:$0xf]
      %v354 = vunpack.c.l.b16 %v330
      %v355 = vunpack.c.l.b16 %v331
      %v356 = vunpack.c.l.b16 %v332
      %v357 = vunpack.c.l.b16 %v333
      %v358 = vpack.c.b16 %v355, %v354
      %v359 = vpack.c.b16 %v357, %v356
      %v378 = vunpack.c.l.b16 %v334
      %v379 = vunpack.c.l.b16 %v335
      %v380 = vunpack.c.l.b16 %v336
      %v381 = vunpack.c.l.b16 %v337
      %v382 = vunpack.c.l.b16 %v338
      %v383 = vunpack.c.l.b16 %v339
      %v384 = vunpack.c.l.b16 %v340
      %v385 = vunpack.c.l.b16 %v341
      %v386 = vunpack.c.l.b16 %v342
      %v387 = vunpack.c.l.b16 %v343
      %v388 = vunpack.c.l.b16 %v344
      %v389 = vunpack.c.l.b16 %v345
      %v390 = vunpack.c.l.b16 %v346
      %v391 = vunpack.c.l.b16 %v347
      %v392 = vunpack.c.l.b16 %v348
      %v393 = vunpack.c.l.b16 %v349
      %v394 = vpack.c.b16 %v379, %v378
      %v395 = vpack.c.b16 %v381, %v380
      %v396 = vpack.c.b16 %v383, %v382
      %v397 = vpack.c.b16 %v385, %v384
      %v398 = vpack.c.b16 %v387, %v386
      %v399 = vpack.c.b16 %v389, %v388
      %v400 = vpack.c.b16 %v391, %v390
      %v401 = vpack.c.b16 %v393, %v392
      %410 = vmatprep.subr.bf16.mxu0 0
      %411 = vmatpush1.bf16.msra.mxu0 %v394
      %412 = vmatprep.subr.bf16.mxu0 0
      %413 = vmatpush1.bf16.msra.mxu0 %v395
      %414 = vmatprep.subr.bf16.mxu0 0
      %415 = vmatpush1.bf16.msra.mxu0 %v396
      %416 = vmatprep.subr.bf16.mxu0 0
      %417 = vmatpush1.bf16.msra.mxu0 %v397
      %418 = vmatprep.subr.bf16.mxu0 0
      %419 = vmatpush1.bf16.msra.mxu0 %v398
      %420 = vmatprep.subr.bf16.mxu0 0
      %421 = vmatpush1.bf16.msra.mxu0 %v399
      %422 = vmatprep.subr.bf16.mxu0 0
      %423 = vmatpush1.bf16.msra.mxu0 %v400
      %424 = vmatprep.subr.bf16.mxu0 0
      %425 = vmatpush1.bf16.msra.mxu0 %v401
      %426 = vmatprep.subr.bf16.mxu0 0
      %427 = vmatpush1.bf16.msra.mxu0 0
      %428 = vmatprep.subr.bf16.mxu0 0
      %429 = vmatpush1.bf16.msra.mxu0 0
      %430 = vmatprep.subr.bf16.mxu0 0
      %431 = vmatpush1.bf16.msra.mxu0 0
      %432 = vmatprep.subr.bf16.mxu0 0
      %433 = vmatpush1.bf16.msra.mxu0 0
      %434 = vmatprep.subr.bf16.mxu0 0
      %435 = vmatpush1.bf16.msra.mxu0 0
      %436 = vmatprep.subr.bf16.mxu0 0
      %437 = vmatpush1.bf16.msra.mxu0 0
      %438 = vmatprep.subr.bf16.mxu0 0
      %439 = vmatpush1.bf16.msra.mxu0 0
      %440 = vmatprep.subr.bf16.mxu0 0
      %441 = vmatpush1.bf16.msra.mxu0 0
      %442 = vmatprep.mubr.bf16.mxu0 0
      %443 = vmatmul.mubr.bf16.gmra.mrb[0].mxu0 %v358
      %v444 = vpop.f32.mrb[0].mxu0
      %v445 = vadd.f32 0.0, %v444
      %v446 = vpop.f32.mrb[0].mxu0
      %v447 = vpop.f32.mrb[0].mxu0
      %v448 = vadd.f32 0.0, %v447
      %v449 = vpop.f32.mrb[0].mxu0
      %450 = vmatprep.mubr.bf16.mxu0 0
      %451 = vmatmul.mubr.bf16.gmra.mrb[0].mxu0 %v359
      %v452 = vpop.f32.mrb[0].mxu0
      %v453 = vadd.f32 0.0, %v452
      %v454 = vpop.f32.mrb[0].mxu0
      %v455 = vpop.f32.mrb[0].mxu0
      %v456 = vadd.f32 0.0, %v455
      %v457 = vpop.f32.mrb[0].mxu0
      %458 = vdwg.mxu0
      %v459 = vadd.f32 %v326, %v445
      %v460 = vadd.f32 %v327, %v448
      %v461 = vadd.f32 %v328, %v453
      %v462 = vadd.f32 %v329, %v456
      %463 = vst [vmem:[#allocation2] sm:$0xff] %v459
      %464 = vst [vmem:[#allocation2 + $0x8] sm:$0xff] %v460
      %465 = vst [vmem:[#allocation2 + $0x10] sm:$0xff] %v461
      %466 = vst [vmem:[#allocation2 + $0x18] sm:$0xff] %v462
      // Predicated region
      $region41: #{aggregate_forward.1} parent=35 // pred_check
        %p467 = pneg %p318
      $region42: #{aggregate_forward.1} parent=35 // pred_check_branch
        %469 = sbr.rel (%p467) target = $region44
      $region43: #{aggregate_forward.1} parent=35 // pred_region
        %v470 = vld [vmem:[#allocation2] sm:$0xff]
        %v471 = vld [vmem:[#allocation2 + $0x8] sm:$0xff]
        %v472 = vld [vmem:[#allocation2 + $0x10] sm:$0xff]
        %v473 = vld [vmem:[#allocation2 + $0x18] sm:$0xff]
        %v474 = vmax.f32 %v470, 1.0
        %v475 = vmax.f32 %v471, 1.0
        %v476 = vmax.f32 %v472, 1.0
        %v477 = vmax.f32 %v473, 1.0
        %v478 = vrcp.pop %v474
        %v479 = vrcp.pop %v475
        %v480 = vrcp.pop %v476
        %v481 = vrcp.pop %v477
        %483 = vset.pattern.permute.xlu0 32
        %484 = vperm.xlu0 %483, %v478
        %v485 = vpop.permute.xlu0 %484
        %488 = vset.pattern.permute.xlu0 32
        %489 = vperm.xlu0 %488, %v479
        %v490 = vpop.permute.xlu0 %489
        %493 = vset.pattern.permute.xlu0 32
        %494 = vperm.xlu0 %493, %v480
        %v495 = vpop.permute.xlu0 %494
        %498 = vset.pattern.permute.xlu0 32
        %499 = vperm.xlu0 %498, %v481
        %v500 = vpop.permute.xlu0 %499
        %v502 = vmul.f32 %v470, %v485
        %v503 = vmul.f32 %v471, %v490
        %v504 = vmul.f32 %v472, %v495
        %v505 = vmul.f32 %v473, %v500
        %v506 = vpack.c.bf16 %v503, %v502
        %v507 = vpack.c.bf16 %v505, %v504
        %v508 = vld [vmem:[%s301] sm:$0xf]
        %v509 = vld [vmem:[%s301 + $0x4] sm:$0xf]
        %v510 = vld [vmem:[%s301 + $0x8] sm:$0xf]
        %v511 = vld [vmem:[%s301 + $0xc] sm:$0xf]
        %v512 = vld [vmem:[%s301 + $0x10] sm:$0xf]
        %v513 = vld [vmem:[%s301 + $0x14] sm:$0xf]
        %v514 = vld [vmem:[%s301 + $0x18] sm:$0xf]
        %v515 = vld [vmem:[%s301 + $0x1c] sm:$0xf]
        %v516 = vld [vmem:[%s301 + $0x20] sm:$0xf]
        %v517 = vld [vmem:[%s301 + $0x24] sm:$0xf]
        %v518 = vld [vmem:[%s301 + $0x28] sm:$0xf]
        %v519 = vld [vmem:[%s301 + $0x2c] sm:$0xf]
        %v520 = vld [vmem:[%s301 + $0x30] sm:$0xf]
        %v521 = vld [vmem:[%s301 + $0x34] sm:$0xf]
        %v522 = vld [vmem:[%s301 + $0x38] sm:$0xf]
        %v523 = vld [vmem:[%s301 + $0x3c] sm:$0xf]
        %v524 = vld [vmem:[%s306] sm:$0xf]
        %v525 = vld [vmem:[%s306 + $0x4] sm:$0xf]
        %v526 = vld [vmem:[%s306 + $0x8] sm:$0xf]
        %v527 = vld [vmem:[%s306 + $0xc] sm:$0xf]
        %v528 = vld [vmem:[%s306 + $0x10] sm:$0xf]
        %v529 = vld [vmem:[%s306 + $0x14] sm:$0xf]
        %v530 = vld [vmem:[%s306 + $0x18] sm:$0xf]
        %v531 = vld [vmem:[%s306 + $0x1c] sm:$0xf]
        %v532 = vld [vmem:[%s306 + $0x20] sm:$0xf]
        %v533 = vld [vmem:[%s306 + $0x24] sm:$0xf]
        %v534 = vld [vmem:[%s306 + $0x28] sm:$0xf]
        %v535 = vld [vmem:[%s306 + $0x2c] sm:$0xf]
        %v536 = vld [vmem:[%s306 + $0x30] sm:$0xf]
        %v537 = vld [vmem:[%s306 + $0x34] sm:$0xf]
        %v538 = vld [vmem:[%s306 + $0x38] sm:$0xf]
        %v539 = vld [vmem:[%s306 + $0x3c] sm:$0xf]
        %v556 = vunpack.c.l.b16 %v524
        %v557 = vunpack.c.l.b16 %v525
        %v558 = vunpack.c.l.b16 %v526
        %v559 = vunpack.c.l.b16 %v527
        %v560 = vunpack.c.l.b16 %v528
        %v561 = vunpack.c.l.b16 %v529
        %v562 = vunpack.c.l.b16 %v530
        %v563 = vunpack.c.l.b16 %v531
        %v564 = vunpack.c.l.b16 %v532
        %v565 = vunpack.c.l.b16 %v533
        %v566 = vunpack.c.l.b16 %v534
        %v567 = vunpack.c.l.b16 %v535
        %v568 = vunpack.c.l.b16 %v536
        %v569 = vunpack.c.l.b16 %v537
        %v570 = vunpack.c.l.b16 %v538
        %v571 = vunpack.c.l.b16 %v539
        %v572 = vpack.c.b16 %v557, %v556
        %v573 = vpack.c.b16 %v559, %v558
        %v574 = vpack.c.b16 %v561, %v560
        %v575 = vpack.c.b16 %v563, %v562
        %v576 = vpack.c.b16 %v565, %v564
        %v577 = vpack.c.b16 %v567, %v566
        %v578 = vpack.c.b16 %v569, %v568
        %v579 = vpack.c.b16 %v571, %v570
        %588 = vmatprep.subr.bf16.mxu0 0
        %589 = vmatpush1.bf16.msra.mxu0 %v572
        %590 = vmatprep.subr.bf16.mxu0 0
        %591 = vmatpush1.bf16.msra.mxu0 %v573
        %592 = vmatprep.subr.bf16.mxu0 0
        %593 = vmatpush1.bf16.msra.mxu0 %v574
        %594 = vmatprep.subr.bf16.mxu0 0
        %595 = vmatpush1.bf16.msra.mxu0 %v575
        %596 = vmatprep.subr.bf16.mxu0 0
        %597 = vmatpush1.bf16.msra.mxu0 %v576
        %598 = vmatprep.subr.bf16.mxu0 0
        %599 = vmatpush1.bf16.msra.mxu0 %v577
        %600 = vmatprep.subr.bf16.mxu0 0
        %601 = vmatpush1.bf16.msra.mxu0 %v578
        %602 = vmatprep.subr.bf16.mxu0 0
        %603 = vmatpush1.bf16.msra.mxu0 %v579
        %604 = vmatprep.subr.bf16.mxu0 0
        %605 = vmatpush1.bf16.msra.mxu0 0
        %606 = vmatprep.subr.bf16.mxu0 0
        %607 = vmatpush1.bf16.msra.mxu0 0
        %608 = vmatprep.subr.bf16.mxu0 0
        %609 = vmatpush1.bf16.msra.mxu0 0
        %610 = vmatprep.subr.bf16.mxu0 0
        %611 = vmatpush1.bf16.msra.mxu0 0
        %612 = vmatprep.subr.bf16.mxu0 0
        %613 = vmatpush1.bf16.msra.mxu0 0
        %614 = vmatprep.subr.bf16.mxu0 0
        %615 = vmatpush1.bf16.msra.mxu0 0
        %616 = vmatprep.subr.bf16.mxu0 0
        %617 = vmatpush1.bf16.msra.mxu0 0
        %618 = vmatprep.subr.bf16.mxu0 0
        %619 = vmatpush1.bf16.msra.mxu0 0
        %620 = vmatprep.mubr.bf16.mxu0 0
        %621 = vmatmul.mubr.bf16.gmra.mrb[0].mxu0 %v507
        %v622 = vpop.f32.mrb[0].mxu0
        %v623 = vadd.f32 0.0, %v622
        %v624 = vpop.f32.mrb[0].mxu0
        %v625 = vpop.f32.mrb[0].mxu0
        %v626 = vadd.f32 0.0, %v625
        %v627 = vpop.f32.mrb[0].mxu0
        %628 = vdwg.mxu0
        %v645 = vunpack.c.l.b16 %v508
        %v646 = vunpack.c.l.b16 %v509
        %v647 = vunpack.c.l.b16 %v510
        %v648 = vunpack.c.l.b16 %v511
        %v649 = vunpack.c.l.b16 %v512
        %v650 = vunpack.c.l.b16 %v513
        %v651 = vunpack.c.l.b16 %v514
        %v652 = vunpack.c.l.b16 %v515
        %v653 = vunpack.c.l.b16 %v516
        %v654 = vunpack.c.l.b16 %v517
        %v655 = vunpack.c.l.b16 %v518
        %v656 = vunpack.c.l.b16 %v519
        %v657 = vunpack.c.l.b16 %v520
        %v658 = vunpack.c.l.b16 %v521
        %v659 = vunpack.c.l.b16 %v522
        %v660 = vunpack.c.l.b16 %v523
        %v661 = vpack.c.b16 %v646, %v645
        %v662 = vpack.c.b16 %v648, %v647
        %v663 = vpack.c.b16 %v650, %v649
        %v664 = vpack.c.b16 %v652, %v651
        %v665 = vpack.c.b16 %v654, %v653
        %v666 = vpack.c.b16 %v656, %v655
        %v667 = vpack.c.b16 %v658, %v657
        %v668 = vpack.c.b16 %v660, %v659
        %677 = vmatprep.subr.bf16.mxu0 0
        %678 = vmatpush1.bf16.msra.mxu0 %v661
        %679 = vmatprep.subr.bf16.mxu0 0
        %680 = vmatpush1.bf16.msra.mxu0 %v662
        %681 = vmatprep.subr.bf16.mxu0 0
        %682 = vmatpush1.bf16.msra.mxu0 %v663
        %683 = vmatprep.subr.bf16.mxu0 0
        %684 = vmatpush1.bf16.msra.mxu0 %v664
        %685 = vmatprep.subr.bf16.mxu0 0
        %686 = vmatpush1.bf16.msra.mxu0 %v665
        %687 = vmatprep.subr.bf16.mxu0 0
        %688 = vmatpush1.bf16.msra.mxu0 %v666
        %689 = vmatprep.subr.bf16.mxu0 0
        %690 = vmatpush1.bf16.msra.mxu0 %v667
        %691 = vmatprep.subr.bf16.mxu0 0
        %692 = vmatpush1.bf16.msra.mxu0 %v668
        %693 = vmatprep.subr.bf16.mxu0 0
        %694 = vmatpush1.bf16.msra.mxu0 0
        %695 = vmatprep.subr.bf16.mxu0 0
        %696 = vmatpush1.bf16.msra.mxu0 0
        %697 = vmatprep.subr.bf16.mxu0 0
        %698 = vmatpush1.bf16.msra.mxu0 0
        %699 = vmatprep.subr.bf16.mxu0 0
        %700 = vmatpush1.bf16.msra.mxu0 0
        %701 = vmatprep.subr.bf16.mxu0 0
        %702 = vmatpush1.bf16.msra.mxu0 0
        %703 = vmatprep.subr.bf16.mxu0 0
        %704 = vmatpush1.bf16.msra.mxu0 0
        %705 = vmatprep.subr.bf16.mxu0 0
        %706 = vmatpush1.bf16.msra.mxu0 0
        %707 = vmatprep.subr.bf16.mxu0 0
        %708 = vmatpush1.bf16.msra.mxu0 0
        %709 = vmatprep.mubr.bf16.mxu0 0
        %710 = vmatmul.mubr.bf16.gmra.mrb[0].mxu0 %v506
        %v711 = vpop.f32.mrb[0].mxu0
        %v712 = vadd.f32 %v623, %v711
        %v713 = vpop.f32.mrb[0].mxu0
        %v714 = vpop.f32.mrb[0].mxu0
        %v715 = vadd.f32 %v626, %v714
        %v716 = vpop.f32.mrb[0].mxu0
        %717 = vdwg.mxu0
        %v718 = vmax.f32 %v712, 0.0
        %v719 = vmax.f32 %v715, 0.0
        %720 = vst [vmem:[%s315] sm:$0xff] %v718
        %721 = vst [vmem:[%s315 + $0x8] sm:$0xff] %v719
      $region44: #{aggregate_forward.1} parent=35 // pred_fallthru
        _
      %s722 = smul.u32 2, %s21
      %p723 = scmp.lt.s32.totalorder %s20, 1
      %s724 = scalar_select %p723, %s20, 1
      %p725 = scmp.lt.s32.totalorder %s722, 1
      %s726 = scalar_select %p725, %s722, 1
      %s727 = smul.addr %s724, 2
      %s728 = sadd.s32 %s726, %s727
      %s729 = smul.addr %s728, 8
      %s730 = scalar_lea.vmem %s4, %s729
      // Predicated region
      $region45: #{aggregate_forward.1} parent=35 // pred_check
        %p731 = pneg %p162
      $region46: #{aggregate_forward.1} parent=35 // pred_check_branch
        %733 = sbr.rel (%p731) target = $region48
      $region47: #{aggregate_forward.1} parent=35 // pred_region
        %s734 = smul.u32 2, %s21
      $region48: #{aggregate_forward.1} parent=35 // pred_fallthru
        _
    $region36: #{aggregate_forward.1} parent=5 // pred_fallthru
      _
    %p735 = scmp.le.s32.totalorder 2, %s10
    // Predicated region
    $region49: #{aggregate_forward.1} parent=5 // pred_check
      %p736 = pneg %p735
    $region50: #{aggregate_forward.1} parent=5 // pred_check_branch
      %738 = sbr.rel (%p736) target = $region52
    $region51: #{aggregate_forward.1} parent=5 // pred_region
      %s739 = ssub.s32 %s10, 2
      // Predicated region
      $region53: #{aggregate_forward.1} parent=51 // pred_check
        %p740 = pneg %p168
      $region54: #{aggregate_forward.1} parent=51 // pred_check_branch
        %742 = sbr.rel (%p740) target = $region56
      $region55: #{aggregate_forward.1} parent=51 // pred_region
        %s743 = smul.u32 2, %s24
        %p744 = scmp.lt.s32.totalorder %s23, 1
        %s745 = scalar_select %p744, %s23, 1
        %p746 = scmp.lt.s32.totalorder %s743, 1
        %s747 = scalar_select %p746, %s743, 1
        %s748 = smul.addr %s745, 2
        %s749 = sadd.s32 %s747, %s748
        %s750 = smul.addr %s749, 8
        %s751 = scalar_lea.vmem %s4, %s750
      $region56: #{aggregate_forward.1} parent=51 // pred_fallthru
        _
    $region52: #{aggregate_forward.1} parent=5 // pred_fallthru
      _
  $region6: #{aggregate_forward.1} parent=0 // loop_footer
    %s14 = sadd.s32 1, %s10
  $region7: #{aggregate_forward.1} parent=0 // loop_footer_branch
    %9 = sbr.rel target = $region3
  $region8: #{aggregate_forward.1} parent=0 // loop_exit
    _

</llo_original>
